<compile_context>
chip_gen: v7x
topology: tpu7x:2x2x1
jax: 0.10.0
libtpu: 0.0.40
codegen_flags: <defaults>
</compile_context>

<pallas_src>
import math
import jax
import jax.numpy as jnp
from jax.experimental import pallas as pl
from jax.experimental.pallas import tpu as pltpu


# --------------------------------------------------------------------------
# small shape helpers
# --------------------------------------------------------------------------
def _round_up(v, m):
    return ((v + m - 1) // m) * m


def _pad2d(a, rows, cols):
    """Zero-pad a 2-D array to (rows, cols), keeping its dtype (no cast pass)."""
    r, c = a.shape
    if r == rows and c == cols:
        return a
    return jnp.pad(a, ((0, rows - r), (0, cols - c)))


def _bias_pad(bias, n_pad):
    if bias is None:
        return None
    b = jnp.asarray(bias, jnp.float32).reshape(1, -1)
    if b.shape[1] == n_pad:
        return b
    return jnp.pad(b, ((0, 0), (0, n_pad - b.shape[1])))


def _row_tile(m_pad, tm_max=256):
    """Row tile: whole dim if it fits, else largest aligned divisor <= tm_max."""
    if m_pad <= tm_max:
        return m_pad
    for t in (256, 128, 64, 32, 16, 8):
        if t <= tm_max and m_pad % t == 0:
            return t
    return 8


def _k_tile(k_pad, tk_max=2048):
    """Contraction tile: full K if it fits (fast path), else largest divisor."""
    if k_pad <= tk_max:
        return k_pad
    for t in (2048, 1024, 512, 256, 128):
        if t <= tk_max and k_pad % t == 0:
            return t
    return 128


# --------------------------------------------------------------------------
# kernels
# --------------------------------------------------------------------------
def _mm_bias_full_k_kernel(a_ref, b_ref, bias_ref, o_ref):
    """Single-K-step:  out = A @ B + bias  (bf16 MXU inputs, f32 accumulate)."""
    acc = jnp.dot(a_ref[...].astype(jnp.bfloat16),
                  b_ref[...].astype(jnp.bfloat16),
                  preferred_element_type=jnp.float32)
    o_ref[...] = (acc + bias_ref[...]).astype(o_ref.dtype)


def _mm_bias_multi_f32_kernel(a_ref, b_ref, bias_ref, o_ref):
    """Multi-K, f32 output: accumulate directly into the resident output block."""
    k = pl.program_id(1)

    @pl.when(k == 0)
    def _init():
        o_ref[...] = jnp.broadcast_to(bias_ref[...], o_ref.shape).astype(o_ref.dtype)

    o_ref[...] += jnp.dot(a_ref[...].astype(jnp.bfloat16),
                          b_ref[...].astype(jnp.bfloat16),
                          preferred_element_type=jnp.float32)


def _mm_bias_multi_acc_kernel(a_ref, b_ref, bias_ref, o_ref, acc_ref):
    """Multi-K, non-f32 output: f32 VMEM scratch accumulator + finalize cast."""
    k = pl.program_id(1)

    @pl.when(k == 0)
    def _init():
        acc_ref[...] = jnp.zeros_like(acc_ref)

    acc_ref[...] += jnp.dot(a_ref[...].astype(jnp.bfloat16),
                            b_ref[...].astype(jnp.bfloat16),
                            preferred_element_type=jnp.float32)

    @pl.when(k == pl.num_programs(1) - 1)
    def _finish():
        o_ref[...] = (acc_ref[...] + bias_ref[...]).astype(o_ref.dtype)


# --------------------------------------------------------------------------
# padded matmul + bias dispatcher
# --------------------------------------------------------------------------
def _matmul_bias_padded(a_p, b_p, bias_p, out_dtype, *, tm_max=256, tk_max=2048):
    """out_p = a_p @ b_p (+ bias_p), all operands already padded/aligned.

    a_p: (M_pad, K_pad)  (any float dtype; cast to bf16 in-kernel)
    b_p: (K_pad, N_pad)  (typically pre-cast bf16 parameters or chained bf16)
    bias_p: (1, N_pad) f32 or None
    Returns the PADDED (M_pad, N_pad) result in out_dtype.
    """
    m_pad, k_pad = a_p.shape
    k_pad_b, n_pad = b_p.shape
    assert k_pad == k_pad_b, (a_p.shape, b_p.shape)
    assert m_pad % 8 == 0 and k_pad % 128 == 0 and n_pad % 128 == 0

    if bias_p is None:
        bias_p = jnp.zeros((1, n_pad), jnp.float32)

    tm = _row_tile(m_pad, tm_max)
    tk = _k_tile(k_pad, tk_max)
    nm, nk = m_pad // tm, k_pad // tk

    a_it = jnp.dtype(a_p.dtype).itemsize
    b_it = jnp.dtype(b_p.dtype).itemsize
    out_it = jnp.dtype(out_dtype).itemsize
    is_f32_out = jnp.dtype(out_dtype) == jnp.dtype(jnp.float32)
    use_scratch = (nk > 1) and not is_f32_out

    cost = pl.CostEstimate(
        flops=2 * m_pad * k_pad * n_pad,
        transcendentals=0,
        bytes_accessed=(m_pad * k_pad * a_it
                        + nm * k_pad * n_pad * b_it     # B re-read per row tile
                        + n_pad * 4
                        + m_pad * n_pad * out_it),
    )

    # VMEM budget from the actual double-buffered working set (+ headroom),
    # instead of a blanket 48 MiB — keeps headroom on v7x's 64 MiB VMEM.
    buf_bytes = (2 * (tm * tk * a_it + tk * n_pad * b_it + n_pad * 4)
                 + 2 * tm * n_pad * out_it
                 + (tm * n_pad * 4 if use_scratch else 0))
    vmem_limit = int(min(max(2 * buf_bytes + (4 << 20), 16 << 20), 96 << 20))

    if nk == 1:
        # Full-K fast path: no accumulator, no init/finalize, one step / row tile.
        grid = (nm,)
        in_specs = [
            pl.BlockSpec((tm, k_pad), lambda i: (i, 0)),
            pl.BlockSpec((k_pad, n_pad), lambda i: (0, 0)),
            pl.BlockSpec((1, n_pad), lambda i: (0, 0)),
        ]
        out_specs = pl.BlockSpec((tm, n_pad), lambda i: (i, 0))
        kernel = _mm_bias_full_k_kernel
        scratch = []
        dims = ("parallel",)
    else:
        grid = (nm, nk)
        in_specs = [
            pl.BlockSpec((tm, tk), lambda i, k: (i, k)),
            pl.BlockSpec((tk, n_pad), lambda i, k: (k, 0)),
            pl.BlockSpec((1, n_pad), lambda i, k: (0, 0)),
        ]
        out_specs = pl.BlockSpec((tm, n_pad), lambda i, k: (i, 0))
        dims = ("parallel", "arbitrary")
        if is_f32_out:
            kernel = _mm_bias_multi_f32_kernel
            scratch = []
        else:
            kernel = _mm_bias_multi_acc_kernel
            scratch = [pltpu.VMEM((tm, n_pad), jnp.float32)]

    return pl.pallas_call(
        kernel,
        out_shape=jax.ShapeDtypeStruct((m_pad, n_pad), out_dtype),
        grid_spec=pltpu.PrefetchScalarGridSpec(
            num_scalar_prefetch=0,
            grid=grid,
            in_specs=in_specs,
            out_specs=out_specs,
            scratch_shapes=scratch,
        ),
        compiler_params=pltpu.CompilerParams(
            dimension_semantics=dims,
            vmem_limit_bytes=vmem_limit,
        ),
        cost_estimate=cost,
    )(a_p, b_p, bias_p)


# --------------------------------------------------------------------------
# functional wrappers (pad on the fly)
# --------------------------------------------------------------------------
def graph_convolution(x, weight, adj, bias=None):
    """GraphConvolution.forward: adj @ (x @ W) + bias via two chained kernels."""
    n, f_in = x.shape
    f_out = weight.shape[1]
    f_in_pad = _round_up(f_in, 128)
    f_out_pad = _round_up(f_out, 128)
    n_chain = _round_up(n, 128)   # support rows == contraction of adj @ support
    m_pad = _round_up(n, 16)

    w_p = _pad2d(jnp.asarray(weight, jnp.float32).astype(jnp.bfloat16),
                 f_in_pad, f_out_pad)
    x_p = _pad2d(jnp.asarray(x, jnp.float32), n_chain, f_in_pad)
    # support kept PADDED in bf16 (pad rows are exact zeros since bias=None)
    # and chained straight into the second matmul — no slice / re-pad pass.
    support_p = _matmul_bias_padded(x_p, w_p, None, jnp.bfloat16)
    adj_p = _pad2d(jnp.asarray(adj, jnp.float32), m_pad, n_chain)
    out_p = _matmul_bias_padded(adj_p, support_p, _bias_pad(bias, f_out_pad),
                                jnp.float32)
    return out_p[:n, :f_out]


def cnnf_classifier(feature, weight, bias):
    """CNNF classifier head (nn.Linear(4096, bit)).

    `weight` is stored [in_features, out_features] (transposed vs torch Linear).
    """
    return CNNFClassifier(weight, bias)(feature)


# --------------------------------------------------------------------------
# module-style wrappers with one-time parameter prep
# --------------------------------------------------------------------------
class BasicModule:
    """JAX-side analogue of the PyTorch BasicModule: forward(*x) is a no-op."""
    # TODO(synk): save_entire/save_dict/load_dict/resume_state are file I/O
    # with no Pallas equivalent; intentionally omitted.

    def __init__(self):
        self.module_name = str(type(self))

    def forward(self, *x):
        return None  # matches `pass` in the reference module

    __call__ = forward


class GraphConvolutionModule(BasicModule):
    """GraphConvolution layer backed by the tiled Pallas kernels.

    The weight is padded to (K_pad, N_pad) and pre-cast to bf16 ONCE at init;
    the bias is padded to (1, N_pad) f32 once at init.
    """

    def __init__(self, in_features, out_features, key, bias=True):
        super().__init__()
        self.in_features = in_features
        self.out_features = out_features
        stdv = 1.0 / math.sqrt(out_features)
        kw, kb = jax.random.split(key)
        self.weight = jax.random.uniform(
            kw, (in_features, out_features), jnp.float32, -stdv, stdv)
        self.bias = (jax.random.uniform(kb, (out_features,), jnp.float32, -stdv, stdv)
                     if bias else None)
        self._f_in_pad = _round_up(in_features, 128)
        self._f_out_pad = _round_up(out_features, 128)
        self._weight_p = _pad2d(self.weight.astype(jnp.bfloat16),
                                self._f_in_pad, self._f_out_pad)
        self._bias_p = _bias_pad(self.bias, self._f_out_pad)

    def forward(self, x, adj):
        n = x.shape[0]
        n_chain = _round_up(n, 128)
        m_pad = _round_up(n, 16)
        x_p = _pad2d(jnp.asarray(x, jnp.float32), n_chain, self._f_in_pad)
        support_p = _matmul_bias_padded(x_p, self._weight_p, None, jnp.bfloat16)
        adj_p = _pad2d(jnp.asarray(adj, jnp.float32), m_pad, n_chain)
        out_p = _matmul_bias_padded(adj_p, support_p, self._bias_p, jnp.float32)
        return out_p[:n, :self.out_features]

    __call__ = forward


class CNNFClassifier:
    """CNNF's nn.Linear(4096, bit) head with parameters padded/cast once."""

    def __init__(self, weight, bias):
        k, n = weight.shape
        self.in_features = k
        self.out_features = n
        self._k_pad = _round_up(k, 128)
        self._n_pad = _round_up(n, 128)
        self._weight_p = _pad2d(jnp.asarray(weight, jnp.float32).astype(jnp.bfloat16),
                                self._k_pad, self._n_pad)
        self._bias_p = _bias_pad(bias, self._n_pad)

    def __call__(self, feature):
        m, k = feature.shape
        assert k == self.in_features
        m_pad = _round_up(m, 16)
        f_p = _pad2d(jnp.asarray(feature, jnp.float32), m_pad, self._k_pad)
        out_p = _matmul_bias_padded(f_p, self._weight_p, self._bias_p, jnp.float32)
        return out_p[:m, :self.out_features]


# --------------------------------------------------------------------------
# self-test
# --------------------------------------------------------------------------
if __name__ == "__main__":
    key = jax.random.PRNGKey(0)
    ks = jax.random.split(key, 8)

    def bf(a):
        # emulate the bf16 rounding the kernel applies to MXU inputs
        return a.astype(jnp.bfloat16).astype(jnp.float32)

    # --- 1) GraphConvolution, toy shape: 8 nodes, 32 -> 16 features -------
    N, F_IN, F_OUT = 8, 32, 16
    x = jax.random.normal(ks[0], (N, F_IN), dtype=jnp.float32)
    adj_raw = jax.random.uniform(ks[1], (N, N), dtype=jnp.float32)
    adj = (adj_raw + adj_raw.T) * 0.5
    adj = adj / jnp.sum(adj, axis=1, keepdims=True)
    layer = GraphConvolutionModule(F_IN, F_OUT, ks[2], bias=True)
    out = jax.block_until_ready(layer(x, adj))
    support_ref = (bf(x) @ bf(layer.weight)).astype(jnp.bfloat16).astype(jnp.float32)
    ref = bf(adj) @ support_ref + layer.bias[None, :]
    assert out.shape == (N, F_OUT)
    assert jnp.allclose(out, ref, atol=1e-2, rtol=1e-2), \
        float(jnp.max(jnp.abs(out - ref)))

    # --- 2) GraphConvolution, multi-row-tile grid (exercises the parallel
    #        row axis + chained padded support): 512 nodes, 96 -> 48 feats --
    N2, F_IN2, F_OUT2 = 512, 96, 48
    x2 = jax.random.normal(ks[3], (N2, F_IN2), dtype=jnp.float32)
    adj2 = jax.random.uniform(ks[4], (N2, N2), dtype=jnp.float32)
    adj2 = adj2 / jnp.sum(adj2, axis=1, keepdims=True)
    layer2 = GraphConvolutionModule(F_IN2, F_OUT2, ks[5], bias=True)
    out2 = jax.block_until_ready(layer2(x2, adj2))
    support2 = (bf(x2) @ bf(layer2.weight)).astype(jnp.bfloat16).astype(jnp.float32)
    ref2 = bf(adj2) @ support2 + layer2.bias[None, :]
    assert out2.shape == (N2, F_OUT2)
    assert jnp.allclose(out2, ref2, atol=1e-2, rtol=1e-2), \
        float(jnp.max(jnp.abs(out2 - ref2)))

    # --- 3) CNNF classifier head: Linear(4096 -> bit), multi-K (tk=2048) --
    B, F_FEAT, BIT = 2, 4096, 32
    feat = jax.random.normal(ks[6], (B, F_FEAT), dtype=jnp.float32)
    w_cls = jax.random.normal(ks[7], (F_FEAT, BIT), dtype=jnp.float32) * 0.01
    b_cls = jnp.zeros((BIT,), jnp.float32)
    head = CNNFClassifier(w_cls, b_cls)
    logits = jax.block_until_ready(head(feat))
    ref3 = bf(feat) @ bf(w_cls) + b_cls[None, :]
    assert logits.shape == (B, BIT)
    assert jnp.allclose(logits, ref3, atol=2e-2, rtol=2e-2), \
        float(jnp.max(jnp.abs(logits - ref3)))

    # functional wrappers agree with the module-style paths
    out_fn = jax.block_until_ready(
        graph_convolution(x, layer.weight, adj, layer.bias))
    assert jnp.allclose(out_fn, out, atol=1e-3, rtol=1e-3)
    logits_fn = jax.block_until_ready(cnnf_classifier(feat, w_cls, b_cls))
    assert jnp.allclose(logits_fn, logits, atol=1e-3, rtol=1e-3)

    # BasicModule.forward is a no-op, matching the reference.
    assert BasicModule().forward(x) is None

    print("KERNEL_OK")
</pallas_src>

<mosaic_0001>
module attributes {stable_mosaic.version = 11 : i64} {
  func.func @_mm_bias_full_k_kernel(%arg0: i32, %arg1: memref<128x128xf32, #tpu.memory_space<vmem>>, %arg2: memref<128x128xbf16, #tpu.memory_space<vmem>>, %arg3: memref<1x128xf32, #tpu.memory_space<vmem>>, %arg4: memref<128x128xbf16, #tpu.memory_space<vmem>>) attributes {dimension_semantics = [#tpu.dimension_semantics<parallel>], iteration_bounds = array<i64: 1>, scalar_prefetch = 0 : i64, scratch_operands = 0 : i64, tpu.core_type = #tpu.core_type<tc>, window_params = [{transform_indices = @transform_0, window_bounds = array<i64: 128, 128>}, {pipeline_mode = #tpu.pipeline_mode<synchronous>, transform_indices = @transform_1, window_bounds = array<i64: 128, 128>}, {pipeline_mode = #tpu.pipeline_mode<synchronous>, transform_indices = @transform_2, window_bounds = array<i64: 1, 128>}, {transform_indices = @transform_3, window_bounds = array<i64: 128, 128>}]} {
    %c0 = arith.constant 0 : index
    %c0_0 = arith.constant 0 : index
    %0 = vector.load %arg1[%c0, %c0_0] : memref<128x128xf32, #tpu.memory_space<vmem>>, vector<128x128xf32>
    %1 = arith.truncf %0 : vector<128x128xf32> to vector<128x128xbf16>
    %c0_1 = arith.constant 0 : index
    %c0_2 = arith.constant 0 : index
    %2 = vector.load %arg2[%c0_1, %c0_2] : memref<128x128xbf16, #tpu.memory_space<vmem>>, vector<128x128xbf16>
    %cst = arith.constant dense<0.000000e+00> : vector<128x128xf32>
    %3 = tpu.matmul %1, %2, %cst {dimension_numbers = #tpu.dot_dimension_numbers<[1], [0], [0], [1], [0, 0, 1, 1], [], []>} : vector<128x128xbf16>, vector<128x128xbf16>, vector<128x128xf32> -> vector<128x128xf32>
    %c0_3 = arith.constant 0 : index
    %c0_4 = arith.constant 0 : index
    %4 = vector.load %arg3[%c0_3, %c0_4] : memref<1x128xf32, #tpu.memory_space<vmem>>, vector<1x128xf32>
    %5 = vector.broadcast %4 : vector<1x128xf32> to vector<128x128xf32>
    %6 = arith.addf %3, %5 : vector<128x128xf32>
    %7 = arith.truncf %6 : vector<128x128xf32> to vector<128x128xbf16>
    %c0_5 = arith.constant 0 : index
    %c0_6 = arith.constant 0 : index
    %8 = vector.load %arg4[%c0_5, %c0_6] : memref<128x128xbf16, #tpu.memory_space<vmem>>, vector<128x128xbf16>
    tpu.vector_store %arg4[%c0_5, %c0_6], %7 {strides = array<i32>} : memref<128x128xbf16, #tpu.memory_space<vmem>>, vector<128x128xbf16>,
    return
  }
  func.func @transform_0(%arg0: i32) -> (i32, i32) {
    %c0_i32 = arith.constant 0 : i32
    %c0_i32_0 = arith.constant 0 : i32
    return %arg0, %c0_i32 : i32, i32
  }
  func.func @transform_1(%arg0: i32) -> (i32, i32) {
    %c0_i32 = arith.constant 0 : i32
    %c0_i32_0 = arith.constant 0 : i32
    %c0_i32_1 = arith.constant 0 : i32
    return %c0_i32, %c0_i32_0 : i32, i32
  }
  func.func @transform_2(%arg0: i32) -> (i32, i32) {
    %c0_i32 = arith.constant 0 : i32
    %c0_i32_0 = arith.constant 0 : i32
    %c0_i32_1 = arith.constant 0 : i32
    return %c0_i32, %c0_i32_0 : i32, i32
  }
  func.func @transform_3(%arg0: i32) -> (i32, i32) {
    %c0_i32 = arith.constant 0 : i32
    %c0_i32_0 = arith.constant 0 : i32
    return %arg0, %c0_i32 : i32, i32
  }
}

</mosaic_0001>

<llo_original>
// kernel: tpu_custom_call.1
$region0: #{tpu_custom_call.1}
  #allocation0 [shape = 'u32[]', space=smem, size = 0x4, offset = 0x4, fixed_abs, tag = 'smem constant byte address 0x4 - core index']
  #allocation1 [shape = 'u32[144,128]{1,0:T(1,128)}', space=vmem, size = 0x12000, scoped, tag = 'internal scratch']
  %s0 = inlined_call_operand.hbm [shape: f32[128,128], index: 0, kind: input, shape index: {}]
  %s1 = inlined_call_operand.hbm [shape: bf16[128,128], index: 1, kind: input, shape index: {}]
  %s2 = inlined_call_operand.vmem [shape: f32[1,128], index: 2, kind: input, shape index: {}]
  %s3 = inlined_call_operand.hbm [shape: bf16[128,128], index: 3, kind: output, shape index: {}]
  %s4 = sld [smem:[#allocation0]]
  $region30: #{tpu_custom_call.1} parent=0
    _
  %s6 = ssub.s32 1, %s4
  %s7 = scalar_select 0, %s6, %s4
  $region1: #{tpu_custom_call.1} parent=0
    #allocation2 [shape = 'u8[65536]{0}', space=vmem, size = 0x10000, scoped, tag = 'input window, operand 0, single buffered']
    #allocation3 [shape = 's32[1]{0}', space=sflag, size = 0x4, scoped, tag = 'scoped memory for tpu_custom_call.1']
    #allocation4 [shape = 's32[1]{0}', space=sflag, size = 0x4, scoped, tag = 'scoped memory for tpu_custom_call.1']
    #allocation5 [shape = 'u8[32768]{0}', space=vmem, size = 0x8000, scoped, tag = 'input window, operand 1, single buffered']
    #allocation6 [shape = 's32[1]{0}', space=sflag, size = 0x4, scoped, tag = 'scoped memory for tpu_custom_call.1']
    #allocation7 [shape = 'u8[32768]{0}', space=vmem, size = 0x8000, scoped, tag = 'output window, operand 0, single buffered']
    %8 = vsyncpa [#allocation3], 0
    %9 = vsyncpa [#allocation6], 0
    %10 = vsyncpa [#allocation4], 0
    // Predicated region
    $region2: #{tpu_custom_call.1} parent=1 // pred_check
      _
    $region3: #{tpu_custom_call.1} parent=1 // pred_check_branch
      %12 = sbr.rel (0) target = $region5
    $region4: #{tpu_custom_call.1} parent=1 // pred_region
      %s14 = ssub.s32 2048, 2048
      %15 = vsyncadd [#allocation3], %s14
      %s16 = sshll.u32 [#allocation2], 4
      %s17 = int_to_ptr.vmem [resolvable:$true] %s16
      %22 = dma.hbm_to_vmem [thread:$0]  %s0, 2048, %s17, [#allocation3], 128, 128, 8
    $region5: #{tpu_custom_call.1} parent=1 // pred_fallthru
      _
    // Predicated region
    $region6: #{tpu_custom_call.1} parent=1 // pred_check
      _
    $region7: #{tpu_custom_call.1} parent=1 // pred_check_branch
      %24 = sbr.rel (0) target = $region9
    $region8: #{tpu_custom_call.1} parent=1 // pred_region
      %s26 = ssub.s32 1024, 1024
      %27 = vsyncadd [#allocation6], %s26
      %s28 = sshll.u32 [#allocation5], 4
      %s29 = int_to_ptr.vmem [resolvable:$true] %s28
      %34 = dma.hbm_to_vmem [thread:$0]  %s1, 1024, %s29, [#allocation6], 64, 64, 4
    $region9: #{tpu_custom_call.1} parent=1 // pred_fallthru
      _
    // Predicated region
    $region10: #{tpu_custom_call.1} parent=1 // pred_check
      _
    $region11: #{tpu_custom_call.1} parent=1 // pred_check_branch
      %36 = sbr.rel (0) target = $region13
    $region12: #{tpu_custom_call.1} parent=1 // pred_region
      _
    $region13: #{tpu_custom_call.1} parent=1 // pred_fallthru
      _
    // Predicated region
    $region14: #{tpu_custom_call.1} parent=1 // pred_check
      _
    $region15: #{tpu_custom_call.1} parent=1 // pred_check_branch
      %38 = sbr.rel (0) target = $region17
    $region16: #{tpu_custom_call.1} parent=1 // pred_region
      %39 = dma.done [#allocation3], 2048
    $region17: #{tpu_custom_call.1} parent=1 // pred_fallthru
      _
    // Predicated region
    $region18: #{tpu_custom_call.1} parent=1 // pred_check
      _
    $region19: #{tpu_custom_call.1} parent=1 // pred_check_branch
      %41 = sbr.rel (0) target = $region21
    $region20: #{tpu_custom_call.1} parent=1 // pred_region
      %42 = dma.done [#allocation6], 1024
    $region21: #{tpu_custom_call.1} parent=1 // pred_fallthru
      _
    %v44 = vld [vmem:[#allocation2] sm:$0xff]
    %v45 = vld [vmem:[#allocation2 + $0x8] sm:$0xff]
    %v46 = vld [vmem:[#allocation2 + $0x10] sm:$0xff]
    %v47 = vld [vmem:[#allocation2 + $0x18] sm:$0xff]
    %v48 = vld [vmem:[#allocation2 + $0x20] sm:$0xff]
    %v49 = vld [vmem:[#allocation2 + $0x28] sm:$0xff]
    %v50 = vld [vmem:[#allocation2 + $0x30] sm:$0xff]
    %v51 = vld [vmem:[#allocation2 + $0x38] sm:$0xff]
    %v52 = vld [vmem:[#allocation2 + $0x40] sm:$0xff]
    %v53 = vld [vmem:[#allocation2 + $0x48] sm:$0xff]
    %v54 = vld [vmem:[#allocation2 + $0x50] sm:$0xff]
    %v55 = vld [vmem:[#allocation2 + $0x58] sm:$0xff]
    %v56 = vld [vmem:[#allocation2 + $0x60] sm:$0xff]
    %v57 = vld [vmem:[#allocation2 + $0x68] sm:$0xff]
    %v58 = vld [vmem:[#allocation2 + $0x70] sm:$0xff]
    %v59 = vld [vmem:[#allocation2 + $0x78] sm:$0xff]
    %v60 = vpack.c.bf16 %v45, %v44
    %v61 = vpack.c.bf16 %v47, %v46
    %v62 = vpack.c.bf16 %v49, %v48
    %v63 = vpack.c.bf16 %v51, %v50
    %v64 = vpack.c.bf16 %v53, %v52
    %v65 = vpack.c.bf16 %v55, %v54
    %v66 = vpack.c.bf16 %v57, %v56
    %v67 = vpack.c.bf16 %v59, %v58
    %v68 = vld [vmem:[#allocation5] sm:$0xf]
    %v69 = vld [vmem:[#allocation5 + $0x4] sm:$0xf]
    %v70 = vld [vmem:[#allocation5 + $0x8] sm:$0xf]
    %v71 = vld [vmem:[#allocation5 + $0xc] sm:$0xf]
    %v72 = vld [vmem:[#allocation5 + $0x10] sm:$0xf]
    %v73 = vld [vmem:[#allocation5 + $0x14] sm:$0xf]
    %v74 = vld [vmem:[#allocation5 + $0x18] sm:$0xf]
    %v75 = vld [vmem:[#allocation5 + $0x1c] sm:$0xf]
    %v76 = vld [vmem:[#allocation5 + $0x20] sm:$0xf]
    %v77 = vld [vmem:[#allocation5 + $0x24] sm:$0xf]
    %v78 = vld [vmem:[#allocation5 + $0x28] sm:$0xf]
    %v79 = vld [vmem:[#allocation5 + $0x2c] sm:$0xf]
    %v80 = vld [vmem:[#allocation5 + $0x30] sm:$0xf]
    %v81 = vld [vmem:[#allocation5 + $0x34] sm:$0xf]
    %v82 = vld [vmem:[#allocation5 + $0x38] sm:$0xf]
    %v83 = vld [vmem:[#allocation5 + $0x3c] sm:$0xf]
    %v84 = vld [vmem:[%s2] sm:$0x1]
    %v86 = vlaneseq
    %v87 = vshrl.u32 %v86, 7
    %v88 = vsub.s32 0, %v87
    %v89 = vrot.slane %v84, %v88
    %v107 = vunpack.c.l.b16 %v68
    %v108 = vunpack.c.l.b16 %v69
    %v109 = vunpack.c.l.b16 %v70
    %v110 = vunpack.c.l.b16 %v71
    %v111 = vunpack.c.l.b16 %v72
    %v112 = vunpack.c.l.b16 %v73
    %v113 = vunpack.c.l.b16 %v74
    %v114 = vunpack.c.l.b16 %v75
    %v115 = vunpack.c.l.b16 %v76
    %v116 = vunpack.c.l.b16 %v77
    %v117 = vunpack.c.l.b16 %v78
    %v118 = vunpack.c.l.b16 %v79
    %v119 = vunpack.c.l.b16 %v80
    %v120 = vunpack.c.l.b16 %v81
    %v121 = vunpack.c.l.b16 %v82
    %v122 = vunpack.c.l.b16 %v83
    %v123 = vpack.c.b16 %v108, %v107
    %v124 = vpack.c.b16 %v110, %v109
    %v125 = vpack.c.b16 %v112, %v111
    %v126 = vpack.c.b16 %v114, %v113
    %v127 = vpack.c.b16 %v116, %v115
    %v128 = vpack.c.b16 %v118, %v117
    %v129 = vpack.c.b16 %v120, %v119
    %v130 = vpack.c.b16 %v122, %v121
    %139 = vmatprep.subr.bf16.mxu0 0
    %140 = vmatpush1.bf16.msra.mxu0 %v123
    %141 = vmatprep.subr.bf16.mxu0 0
    %142 = vmatpush1.bf16.msra.mxu0 %v124
    %143 = vmatprep.subr.bf16.mxu0 0
    %144 = vmatpush1.bf16.msra.mxu0 %v125
    %145 = vmatprep.subr.bf16.mxu0 0
    %146 = vmatpush1.bf16.msra.mxu0 %v126
    %147 = vmatprep.subr.bf16.mxu0 0
    %148 = vmatpush1.bf16.msra.mxu0 %v127
    %149 = vmatprep.subr.bf16.mxu0 0
    %150 = vmatpush1.bf16.msra.mxu0 %v128
    %151 = vmatprep.subr.bf16.mxu0 0
    %152 = vmatpush1.bf16.msra.mxu0 %v129
    %153 = vmatprep.subr.bf16.mxu0 0
    %154 = vmatpush1.bf16.msra.mxu0 %v130
    %155 = vmatprep.subr.bf16.mxu0 0
    %156 = vmatpush1.bf16.msra.mxu0 0
    %157 = vmatprep.subr.bf16.mxu0 0
    %158 = vmatpush1.bf16.msra.mxu0 0
    %159 = vmatprep.subr.bf16.mxu0 0
    %160 = vmatpush1.bf16.msra.mxu0 0
    %161 = vmatprep.subr.bf16.mxu0 0
    %162 = vmatpush1.bf16.msra.mxu0 0
    %163 = vmatprep.subr.bf16.mxu0 0
    %164 = vmatpush1.bf16.msra.mxu0 0
    %165 = vmatprep.subr.bf16.mxu0 0
    %166 = vmatpush1.bf16.msra.mxu0 0
    %167 = vmatprep.subr.bf16.mxu0 0
    %168 = vmatpush1.bf16.msra.mxu0 0
    %169 = vmatprep.subr.bf16.mxu0 0
    %170 = vmatpush1.bf16.msra.mxu0 0
    %171 = vmatprep.mubr.bf16.mxu0 0
    %172 = vmatmul.mubr.bf16.gmra.mrb[0].mxu0 %v60
    %v173 = vpop.f32.mrb[0].mxu0
    %v174 = vadd.f32 %v89, %v173
    %v175 = vpop.f32.mrb[0].mxu0
    %v176 = vpop.f32.mrb[0].mxu0
    %v177 = vadd.f32 %v89, %v176
    %v178 = vpop.f32.mrb[0].mxu0
    %179 = vmatprep.mubr.bf16.mxu0 0
    %180 = vmatmul.mubr.bf16.gmra.mrb[0].mxu0 %v61
    %v181 = vpop.f32.mrb[0].mxu0
    %v182 = vadd.f32 %v89, %v181
    %v183 = vpop.f32.mrb[0].mxu0
    %v184 = vpop.f32.mrb[0].mxu0
    %v185 = vadd.f32 %v89, %v184
    %v186 = vpop.f32.mrb[0].mxu0
    %187 = vmatprep.mubr.bf16.mxu0 0
    %188 = vmatmul.mubr.bf16.gmra.mrb[0].mxu0 %v62
    %v189 = vpop.f32.mrb[0].mxu0
    %v190 = vadd.f32 %v89, %v189
    %v191 = vpop.f32.mrb[0].mxu0
    %v192 = vpop.f32.mrb[0].mxu0
    %v193 = vadd.f32 %v89, %v192
    %v194 = vpop.f32.mrb[0].mxu0
    %195 = vmatprep.mubr.bf16.mxu0 0
    %196 = vmatmul.mubr.bf16.gmra.mrb[0].mxu0 %v63
    %v197 = vpop.f32.mrb[0].mxu0
    %v198 = vadd.f32 %v89, %v197
    %v199 = vpop.f32.mrb[0].mxu0
    %v200 = vpop.f32.mrb[0].mxu0
    %v201 = vadd.f32 %v89, %v200
    %v202 = vpop.f32.mrb[0].mxu0
    %203 = vmatprep.mubr.bf16.mxu0 0
    %204 = vmatmul.mubr.bf16.gmra.mrb[0].mxu0 %v64
    %v205 = vpop.f32.mrb[0].mxu0
    %v206 = vadd.f32 %v89, %v205
    %v207 = vpop.f32.mrb[0].mxu0
    %v208 = vpop.f32.mrb[0].mxu0
    %v209 = vadd.f32 %v89, %v208
    %v210 = vpop.f32.mrb[0].mxu0
    %211 = vmatprep.mubr.bf16.mxu0 0
    %212 = vmatmul.mubr.bf16.gmra.mrb[0].mxu0 %v65
    %v213 = vpop.f32.mrb[0].mxu0
    %v214 = vadd.f32 %v89, %v213
    %v215 = vpop.f32.mrb[0].mxu0
    %v216 = vpop.f32.mrb[0].mxu0
    %v217 = vadd.f32 %v89, %v216
    %v218 = vpop.f32.mrb[0].mxu0
    %219 = vmatprep.mubr.bf16.mxu0 0
    %220 = vmatmul.mubr.bf16.gmra.mrb[0].mxu0 %v66
    %v221 = vpop.f32.mrb[0].mxu0
    %v222 = vadd.f32 %v89, %v221
    %v223 = vpop.f32.mrb[0].mxu0
    %v224 = vpop.f32.mrb[0].mxu0
    %v225 = vadd.f32 %v89, %v224
    %v226 = vpop.f32.mrb[0].mxu0
    %227 = vmatprep.mubr.bf16.mxu0 0
    %228 = vmatmul.mubr.bf16.gmra.mrb[0].mxu0 %v67
    %v229 = vpop.f32.mrb[0].mxu0
    %v230 = vadd.f32 %v89, %v229
    %v231 = vpop.f32.mrb[0].mxu0
    %v232 = vpop.f32.mrb[0].mxu0
    %v233 = vadd.f32 %v89, %v232
    %v234 = vpop.f32.mrb[0].mxu0
    %235 = vdwg.mxu0
    %v236 = vpack.c.bf16 %v177, %v174
    %v237 = vpack.c.bf16 %v185, %v182
    %v238 = vpack.c.bf16 %v193, %v190
    %v239 = vpack.c.bf16 %v201, %v198
    %v240 = vpack.c.bf16 %v209, %v206
    %v241 = vpack.c.bf16 %v217, %v214
    %v242 = vpack.c.bf16 %v225, %v222
    %v243 = vpack.c.bf16 %v233, %v230
    %v252 = vunpack.c.l.b16 %v236
    %v253 = vunpack.c.h.b16 %v236
    %v254 = vunpack.c.l.b16 %v237
    %v255 = vunpack.c.h.b16 %v237
    %v256 = vunpack.c.l.b16 %v238
    %v257 = vunpack.c.h.b16 %v238
    %v258 = vunpack.c.l.b16 %v239
    %v259 = vunpack.c.h.b16 %v239
    %v260 = vunpack.c.l.b16 %v240
    %v261 = vunpack.c.h.b16 %v240
    %v262 = vunpack.c.l.b16 %v241
    %v263 = vunpack.c.h.b16 %v241
    %v264 = vunpack.c.l.b16 %v242
    %v265 = vunpack.c.h.b16 %v242
    %v266 = vunpack.c.l.b16 %v243
    %v267 = vunpack.c.h.b16 %v243
    %v268 = vpack.c.b16 %v252, %v252
    %v269 = vpack.c.b16 %v253, %v253
    %v270 = vpack.c.b16 %v254, %v254
    %v271 = vpack.c.b16 %v255, %v255
    %v272 = vpack.c.b16 %v256, %v256
    %v273 = vpack.c.b16 %v257, %v257
    %v274 = vpack.c.b16 %v258, %v258
    %v275 = vpack.c.b16 %v259, %v259
    %v276 = vpack.c.b16 %v260, %v260
    %v277 = vpack.c.b16 %v261, %v261
    %v278 = vpack.c.b16 %v262, %v262
    %v279 = vpack.c.b16 %v263, %v263
    %v280 = vpack.c.b16 %v264, %v264
    %v281 = vpack.c.b16 %v265, %v265
    %v282 = vpack.c.b16 %v266, %v266
    %v283 = vpack.c.b16 %v267, %v267
    %300 = vst [vmem:[#allocation7] sm:$0xf] %v268
    %301 = vst [vmem:[#allocation7 + $0x4] sm:$0xf] %v269
    %302 = vst [vmem:[#allocation7 + $0x8] sm:$0xf] %v270
    %303 = vst [vmem:[#allocation7 + $0xc] sm:$0xf] %v271
    %304 = vst [vmem:[#allocation7 + $0x10] sm:$0xf] %v272
    %305 = vst [vmem:[#allocation7 + $0x14] sm:$0xf] %v273
    %306 = vst [vmem:[#allocation7 + $0x18] sm:$0xf] %v274
    %307 = vst [vmem:[#allocation7 + $0x1c] sm:$0xf] %v275
    %308 = vst [vmem:[#allocation7 + $0x20] sm:$0xf] %v276
    %309 = vst [vmem:[#allocation7 + $0x24] sm:$0xf] %v277
    %310 = vst [vmem:[#allocation7 + $0x28] sm:$0xf] %v278
    %311 = vst [vmem:[#allocation7 + $0x2c] sm:$0xf] %v279
    %312 = vst [vmem:[#allocation7 + $0x30] sm:$0xf] %v280
    %313 = vst [vmem:[#allocation7 + $0x34] sm:$0xf] %v281
    %314 = vst [vmem:[#allocation7 + $0x38] sm:$0xf] %v282
    %315 = vst [vmem:[#allocation7 + $0x3c] sm:$0xf] %v283
    // Predicated region
    $region22: #{tpu_custom_call.1} parent=1 // pred_check
      _
    $region23: #{tpu_custom_call.1} parent=1 // pred_check_branch
      %317 = sbr.rel (0) target = $region25
    $region24: #{tpu_custom_call.1} parent=1 // pred_region
      %s319 = ssub.s32 1024, 1024
      %320 = vsyncadd [#allocation4], %s319
      %s321 = sshll.u32 [#allocation7], 4
      %s322 = int_to_ptr.vmem [resolvable:$true] %s321
      %327 = dma.vmem_to_hbm [thread:$0]  %s322, 1024, %s3, [#allocation4], 64, 64, 4
    $region25: #{tpu_custom_call.1} parent=1 // pred_fallthru
      _
    // Predicated region
    $region26: #{tpu_custom_call.1} parent=1 // pred_check
      _
    $region27: #{tpu_custom_call.1} parent=1 // pred_check_branch
      %329 = sbr.rel (0) target = $region29
    $region28: #{tpu_custom_call.1} parent=1 // pred_region
      %330 = dma.done [#allocation4], 1024
    $region29: #{tpu_custom_call.1} parent=1 // pred_fallthru
      _
    %331 = vsyncpa [#allocation3], 1
    %332 = vsyncpa [#allocation6], 1
    %333 = vsyncpa [#allocation4], 1

</llo_original>
